<compile_context>
chip_gen: v7x
topology: tpu7x:2x2x1
jax: 0.10.0
libtpu: 0.0.40
codegen_flags: <defaults>
</compile_context>

<pallas_src>
import jax
import jax.numpy as jnp
from jax.experimental import pallas as pl
from jax.experimental.pallas import tpu as pltpu

HIDDEN = 512


def _round_up(n, m):
    return ((n + m - 1) // m) * m


def encoder1_kernel(x_ref, w1_ref, b1_ref, w2_ref, b2_ref, out_ref):
    # x arrives f32; cast to bf16 here (VPU, overlapped with MXU) so the
    # wrapper never pays a separate HBM pass just to quantize the input.
    x = x_ref[...].astype(jnp.bfloat16)
    # First matmul on the MXU (bf16 inputs, f32 accumulation).
    h = jnp.dot(x, w1_ref[...], preferred_element_type=jnp.float32)
    h = jnp.maximum(h + b1_ref[...], 0.0)          # bias + ReLU in f32 (VPU)
    # Second matmul: hidden activation back to bf16 for the MXU.
    out = jnp.dot(h.astype(jnp.bfloat16), w2_ref[...],
                  preferred_element_type=jnp.float32)
    # Single contiguous (tb, 2*latent) f32 store; mu/log_var split happens
    # outside the kernel (free XLA slice).
    out_ref[...] = (out + b2_ref[...]).astype(out_ref.dtype)


def _choose_tile_b(B, d_in, two_latent, tile_b):
    """Batch tile: multiple of 8, >=2 grid steps when possible, VMEM-bounded."""
    tb = min(tile_b, _round_up(B, 8))
    if B > 8:
        # Keep at least 2 grid steps so v7x's two TensorCores both get work
        # (dimension_semantics=("parallel",) only shards axes with >1 step).
        tb = min(tb, _round_up(pl.cdiv(B, 2), 8))

    def vmem_bytes(t):
        return (2 * t * d_in * 4            # x tile (f32), double-buffered
                + 2 * t * two_latent * 4    # out tile (f32), double-buffered
                + d_in * HIDDEN * 2         # w1 bf16 (resident)
                + HIDDEN * two_latent * 2   # w2 bf16 (resident)
                + t * HIDDEN * 6)           # hidden activation f32 + bf16 copy

    # Stay well under v7x's 64 MiB physical VMEM (32 MiB scoped default).
    while tb > 8 and vmem_bytes(tb) > 24 * 1024 * 1024:
        tb = max(8, _round_up(tb // 2, 8))
    return tb


def encoder1_forward(x, w1, b1, w2, b2, *, tile_b=2048):
    """x: (B, input_dim) f32. w1:(input_dim,512) bf16, b1:(1,512) f32,
    w2:(512, 2*latent) bf16, b2:(1, 2*latent) f32. Returns (mu, log_var),
    each (B, latent) f32."""
    B, d_in = x.shape
    two_latent = w2.shape[1]
    latent = two_latent // 2

    # Weights are ideally stored as bf16 parameters (see init_params); these
    # casts are no-ops in that case.  Biases stay f32.
    w1_bf = w1 if w1.dtype == jnp.bfloat16 else w1.astype(jnp.bfloat16)
    w2_bf = w2 if w2.dtype == jnp.bfloat16 else w2.astype(jnp.bfloat16)
    b1_f = b1.astype(jnp.float32).reshape(1, HIDDEN)
    b2_f = b2.astype(jnp.float32).reshape(1, two_latent)

    tb = _choose_tile_b(B, d_in, two_latent, tile_b)
    grid = (pl.cdiv(B, tb),)

    cost = pl.CostEstimate(
        flops=2 * B * (d_in * HIDDEN + HIDDEN * two_latent),
        transcendentals=0,
        bytes_accessed=(B * d_in * 4 + B * two_latent * 4
                        + d_in * HIDDEN * 2 + HIDDEN * two_latent * 2
                        + HIDDEN * 4 + two_latent * 4),
    )

    out = pl.pallas_call(
        encoder1_kernel,
        out_shape=jax.ShapeDtypeStruct((B, two_latent), jnp.float32),
        grid_spec=pltpu.PrefetchScalarGridSpec(
            num_scalar_prefetch=0,
            grid=grid,
            in_specs=[
                pl.BlockSpec((tb, d_in), lambda i: (i, 0)),             # x tile (f32)
                pl.BlockSpec((d_in, HIDDEN), lambda i: (0, 0)),         # w1 (resident)
                pl.BlockSpec((1, HIDDEN), lambda i: (0, 0)),            # b1 (resident)
                pl.BlockSpec((HIDDEN, two_latent), lambda i: (0, 0)),   # w2 (resident)
                pl.BlockSpec((1, two_latent), lambda i: (0, 0)),        # b2 (resident)
            ],
            out_specs=pl.BlockSpec((tb, two_latent), lambda i: (i, 0)),
        ),
        compiler_params=pltpu.CompilerParams(
            dimension_semantics=("parallel",),
            vmem_limit_bytes=32 * 1024 * 1024,
        ),
        cost_estimate=cost,
    )(x, w1_bf, b1_f, w2_bf, b2_f)

    # chunk(2, dim=-1): first half -> mu, second half -> log_var (free slice).
    return out[:, :latent], out[:, latent:]


def init_params(key, input_dim, latent_dim, hidden=HIDDEN):
    """Deterministic synthetic params (torch-Linear-like uniform init).
    Weights are returned as bf16 (persistent MXU dtype); biases as f32."""
    k1, k2, k3, k4 = jax.random.split(key, 4)
    bound1 = 1.0 / jnp.sqrt(input_dim)
    bound2 = 1.0 / jnp.sqrt(hidden)
    w1 = jax.random.uniform(k1, (input_dim, hidden), jnp.float32, -bound1, bound1)
    b1 = jax.random.uniform(k2, (1, hidden), jnp.float32, -bound1, bound1)
    w2 = jax.random.uniform(k3, (hidden, 2 * latent_dim), jnp.float32, -bound2, bound2)
    b2 = jax.random.uniform(k4, (1, 2 * latent_dim), jnp.float32, -bound2, bound2)
    return w1.astype(jnp.bfloat16), b1, w2.astype(jnp.bfloat16), b2


if __name__ == "__main__":
    B, input_dim, latent_dim = 8, 32, 16

    key = jax.random.PRNGKey(0)
    kx, kp = jax.random.split(key)
    x = jax.random.normal(kx, (B, input_dim), jnp.float32)
    w1, b1, w2, b2 = init_params(kp, input_dim, latent_dim)

    mu, log_var = encoder1_forward(x, w1, b1, w2, b2)
    jax.block_until_ready((mu, log_var))

    # Pure-JAX reference with the same quantization choices as the kernel
    # (bf16 MXU inputs, f32 accumulation, f32 bias/ReLU).
    xq = x.astype(jnp.bfloat16)
    h_ref = jnp.maximum(
        jnp.dot(xq, w1, preferred_element_type=jnp.float32) + b1, 0.0)
    out_ref = jnp.dot(h_ref.astype(jnp.bfloat16), w2,
                      preferred_element_type=jnp.float32) + b2
    mu_ref, lv_ref = out_ref[:, :latent_dim], out_ref[:, latent_dim:]

    assert mu.shape == (B, latent_dim) and log_var.shape == (B, latent_dim)
    assert jnp.allclose(mu, mu_ref, atol=2e-3, rtol=2e-3)
    assert jnp.allclose(log_var, lv_ref, atol=2e-3, rtol=2e-3)

    # Note: at these toy shapes the pallas_call is launch-overhead dominated;
    # the structure (resident weights, in-kernel x cast, large parallel batch
    # tiles, single contiguous output tile) is what pays off at large B.
    print("KERNEL_OK")
</pallas_src>

<mosaic_0001>
module attributes {stable_mosaic.version = 11 : i64} {
  func.func @encoder1_kernel(%arg0: i32, %arg1: memref<8x32xf32, #tpu.memory_space<vmem>>, %arg2: memref<32x512xbf16, #tpu.memory_space<vmem>>, %arg3: memref<1x512xf32, #tpu.memory_space<vmem>>, %arg4: memref<512x32xbf16, #tpu.memory_space<vmem>>, %arg5: memref<1x32xf32, #tpu.memory_space<vmem>>, %arg6: memref<8x32xf32, #tpu.memory_space<vmem>>) attributes {dimension_semantics = [#tpu.dimension_semantics<parallel>], iteration_bounds = array<i64: 1>, scalar_prefetch = 0 : i64, scratch_operands = 0 : i64, tpu.core_type = #tpu.core_type<tc>, window_params = [{transform_indices = @transform_0, window_bounds = array<i64: 8, 32>}, {pipeline_mode = #tpu.pipeline_mode<synchronous>, transform_indices = @transform_1, window_bounds = array<i64: 32, 512>}, {pipeline_mode = #tpu.pipeline_mode<synchronous>, transform_indices = @transform_2, window_bounds = array<i64: 1, 512>}, {pipeline_mode = #tpu.pipeline_mode<synchronous>, transform_indices = @transform_3, window_bounds = array<i64: 512, 32>}, {pipeline_mode = #tpu.pipeline_mode<synchronous>, transform_indices = @transform_4, window_bounds = array<i64: 1, 32>}, {transform_indices = @transform_5, window_bounds = array<i64: 8, 32>}]} {
    %c0 = arith.constant 0 : index
    %c0_0 = arith.constant 0 : index
    %0 = vector.load %arg1[%c0, %c0_0] : memref<8x32xf32, #tpu.memory_space<vmem>>, vector<8x32xf32>
    %1 = arith.truncf %0 : vector<8x32xf32> to vector<8x32xbf16>
    %c0_1 = arith.constant 0 : index
    %c0_2 = arith.constant 0 : index
    %2 = vector.load %arg2[%c0_1, %c0_2] : memref<32x512xbf16, #tpu.memory_space<vmem>>, vector<32x512xbf16>
    %cst = arith.constant dense<0.000000e+00> : vector<8x512xf32>
    %3 = tpu.matmul %1, %2, %cst {dimension_numbers = #tpu.dot_dimension_numbers<[1], [0], [0], [1], [0, 0, 1, 1], [], []>} : vector<8x32xbf16>, vector<32x512xbf16>, vector<8x512xf32> -> vector<8x512xf32>
    %c0_3 = arith.constant 0 : index
    %c0_4 = arith.constant 0 : index
    %4 = vector.load %arg3[%c0_3, %c0_4] : memref<1x512xf32, #tpu.memory_space<vmem>>, vector<1x512xf32>
    %5 = vector.broadcast %4 : vector<1x512xf32> to vector<8x512xf32>
    %6 = arith.addf %3, %5 : vector<8x512xf32>
    %cst_5 = arith.constant 0.000000e+00 : f32
    %7 = vector.broadcast %cst_5 : f32 to vector<8x512xf32>
    %8 = arith.maximumf %6, %7 : vector<8x512xf32>
    %9 = arith.truncf %8 : vector<8x512xf32> to vector<8x512xbf16>
    %c0_6 = arith.constant 0 : index
    %c0_7 = arith.constant 0 : index
    %10 = vector.load %arg4[%c0_6, %c0_7] : memref<512x32xbf16, #tpu.memory_space<vmem>>, vector<512x32xbf16>
    %cst_8 = arith.constant dense<0.000000e+00> : vector<8x32xf32>
    %11 = tpu.matmul %9, %10, %cst_8 {dimension_numbers = #tpu.dot_dimension_numbers<[1], [0], [0], [1], [0, 0, 1, 1], [], []>} : vector<8x512xbf16>, vector<512x32xbf16>, vector<8x32xf32> -> vector<8x32xf32>
    %c0_9 = arith.constant 0 : index
    %c0_10 = arith.constant 0 : index
    %12 = vector.load %arg5[%c0_9, %c0_10] : memref<1x32xf32, #tpu.memory_space<vmem>>, vector<1x32xf32>
    %13 = vector.broadcast %12 : vector<1x32xf32> to vector<8x32xf32>
    %14 = arith.addf %11, %13 : vector<8x32xf32>
    %c0_11 = arith.constant 0 : index
    %c0_12 = arith.constant 0 : index
    %15 = vector.load %arg6[%c0_11, %c0_12] : memref<8x32xf32, #tpu.memory_space<vmem>>, vector<8x32xf32>
    tpu.vector_store %arg6[%c0_11, %c0_12], %14 {strides = array<i32>} : memref<8x32xf32, #tpu.memory_space<vmem>>, vector<8x32xf32>,
    return
  }
  func.func @transform_0(%arg0: i32) -> (i32, i32) {
    %c0_i32 = arith.constant 0 : i32
    %c0_i32_0 = arith.constant 0 : i32
    return %arg0, %c0_i32 : i32, i32
  }
  func.func @transform_1(%arg0: i32) -> (i32, i32) {
    %c0_i32 = arith.constant 0 : i32
    %c0_i32_0 = arith.constant 0 : i32
    %c0_i32_1 = arith.constant 0 : i32
    return %c0_i32, %c0_i32_0 : i32, i32
  }
  func.func @transform_2(%arg0: i32) -> (i32, i32) {
    %c0_i32 = arith.constant 0 : i32
    %c0_i32_0 = arith.constant 0 : i32
    %c0_i32_1 = arith.constant 0 : i32
    return %c0_i32, %c0_i32_0 : i32, i32
  }
  func.func @transform_3(%arg0: i32) -> (i32, i32) {
    %c0_i32 = arith.constant 0 : i32
    %c0_i32_0 = arith.constant 0 : i32
    %c0_i32_1 = arith.constant 0 : i32
    return %c0_i32, %c0_i32_0 : i32, i32
  }
  func.func @transform_4(%arg0: i32) -> (i32, i32) {
    %c0_i32 = arith.constant 0 : i32
    %c0_i32_0 = arith.constant 0 : i32
    %c0_i32_1 = arith.constant 0 : i32
    return %c0_i32, %c0_i32_0 : i32, i32
  }
  func.func @transform_5(%arg0: i32) -> (i32, i32) {
    %c0_i32 = arith.constant 0 : i32
    %c0_i32_0 = arith.constant 0 : i32
    return %arg0, %c0_i32 : i32, i32
  }
}

</mosaic_0001>

<llo_original>
// kernel: tpu_custom_call.1
$region0: #{tpu_custom_call.1}
  #allocation0 [shape = 'u32[]', space=smem, size = 0x4, offset = 0x4, fixed_abs, tag = 'smem constant byte address 0x4 - core index']
  #allocation1 [shape = 'u32[144,128]{1,0:T(1,128)}', space=vmem, size = 0x12000, scoped, tag = 'internal scratch']
  %s0 = inlined_call_operand.vmem [shape: f32[8,32], index: 0, kind: input, shape index: {}]
  %s1 = inlined_call_operand.vmem [shape: bf16[32,512], index: 1, kind: input, shape index: {}]
  %s2 = inlined_call_operand.vmem [shape: f32[1,512], index: 2, kind: input, shape index: {}]
  %s3 = inlined_call_operand.vmem [shape: bf16[512,32], index: 3, kind: input, shape index: {}]
  %s4 = inlined_call_operand.vmem [shape: f32[1,32], index: 4, kind: input, shape index: {}]
  %s5 = inlined_call_operand.hbm [shape: f32[8,32], index: 5, kind: output, shape index: {}]
  %s6 = sld [smem:[#allocation0]]
  $region30: #{tpu_custom_call.1} parent=0
    _
  %s8 = ssub.s32 1, %s6
  %s9 = scalar_select 0, %s8, %s6
  $region1: #{tpu_custom_call.1} parent=0
    #allocation2 [shape = 'u8[4096]{0}', space=vmem, size = 0x1000, scoped, tag = 'output window, operand 0, single buffered']
    #allocation3 [shape = 's32[1]{0}', space=sflag, size = 0x4, scoped, tag = 'scoped memory for tpu_custom_call.1']
    %10 = vsyncpa [#allocation3], 0
    // Predicated region
    $region2: #{tpu_custom_call.1} parent=1 // pred_check
      _
    $region3: #{tpu_custom_call.1} parent=1 // pred_check_branch
      %12 = sbr.rel (0) target = $region5
    $region4: #{tpu_custom_call.1} parent=1 // pred_region
      _
    $region5: #{tpu_custom_call.1} parent=1 // pred_fallthru
      _
    // Predicated region
    $region6: #{tpu_custom_call.1} parent=1 // pred_check
      _
    $region7: #{tpu_custom_call.1} parent=1 // pred_check_branch
      %14 = sbr.rel (0) target = $region9
    $region8: #{tpu_custom_call.1} parent=1 // pred_region
      _
    $region9: #{tpu_custom_call.1} parent=1 // pred_fallthru
      _
    // Predicated region
    $region10: #{tpu_custom_call.1} parent=1 // pred_check
      _
    $region11: #{tpu_custom_call.1} parent=1 // pred_check_branch
      %16 = sbr.rel (0) target = $region13
    $region12: #{tpu_custom_call.1} parent=1 // pred_region
      _
    $region13: #{tpu_custom_call.1} parent=1 // pred_fallthru
      _
    // Predicated region
    $region14: #{tpu_custom_call.1} parent=1 // pred_check
      _
    $region15: #{tpu_custom_call.1} parent=1 // pred_check_branch
      %18 = sbr.rel (0) target = $region17
    $region16: #{tpu_custom_call.1} parent=1 // pred_region
      _
    $region17: #{tpu_custom_call.1} parent=1 // pred_fallthru
      _
    // Predicated region
    $region18: #{tpu_custom_call.1} parent=1 // pred_check
      _
    $region19: #{tpu_custom_call.1} parent=1 // pred_check_branch
      %20 = sbr.rel (0) target = $region21
    $region20: #{tpu_custom_call.1} parent=1 // pred_region
      _
    $region21: #{tpu_custom_call.1} parent=1 // pred_fallthru
      _
    %v22 = vld [vmem:[%s0] sm:$0xff]
    %v23 = vpack.c.bf16 %v22, %v22
    %v24 = vld [vmem:[%s1] sm:$0xff]
    %v25 = vld [vmem:[%s1 + $0x8] sm:$0xff]
    %v26 = vld [vmem:[%s1 + $0x10] sm:$0xff]
    %v27 = vld [vmem:[%s1 + $0x18] sm:$0xff]
    %v28 = vld [vmem:[%s1 + $0x20] sm:$0xff]
    %v29 = vld [vmem:[%s1 + $0x28] sm:$0xff]
    %v30 = vld [vmem:[%s1 + $0x30] sm:$0xff]
    %v31 = vld [vmem:[%s1 + $0x38] sm:$0xff]
    %v32 = vld [vmem:[%s2] sm:$0xf]
    %v34 = vlaneseq
    %v35 = vshrl.u32 %v34, 7
    %v36 = vsub.s32 0, %v35
    %v37 = vrot.slane %v32, %v36
    %v38 = vlaneseq
    %v39 = vshrl.u32 %v38, 7
    %v40 = vsub.s32 1, %v39
    %v41 = vrot.slane %v32, %v40
    %v42 = vlaneseq
    %v43 = vshrl.u32 %v42, 7
    %v44 = vsub.s32 2, %v43
    %v45 = vrot.slane %v32, %v44
    %v46 = vlaneseq
    %v47 = vshrl.u32 %v46, 7
    %v48 = vsub.s32 3, %v47
    %v49 = vrot.slane %v32, %v48
    %v62 = vunpack.c.l.b16 %v24
    %v63 = vunpack.c.h.b16 %v24
    %v64 = vunpack.c.l.b16 %v25
    %v65 = vunpack.c.h.b16 %v25
    %v66 = vunpack.c.l.b16 %v26
    %v67 = vunpack.c.h.b16 %v26
    %v68 = vunpack.c.l.b16 %v27
    %v69 = vunpack.c.h.b16 %v27
    %v70 = vunpack.c.l.b16 %v28
    %v71 = vunpack.c.h.b16 %v28
    %v72 = vunpack.c.l.b16 %v29
    %v73 = vunpack.c.h.b16 %v29
    %v74 = vunpack.c.l.b16 %v30
    %v75 = vunpack.c.h.b16 %v30
    %v76 = vunpack.c.l.b16 %v31
    %v77 = vunpack.c.h.b16 %v31
    %v78 = vpack.c.b16 %v66, %v62
    %v79 = vpack.c.b16 %v67, %v63
    %v80 = vpack.c.b16 %v68, %v64
    %v81 = vpack.c.b16 %v69, %v65
    %v82 = vpack.c.b16 %v74, %v70
    %v83 = vpack.c.b16 %v75, %v71
    %v84 = vpack.c.b16 %v76, %v72
    %v85 = vpack.c.b16 %v77, %v73
    %vm94 = vcmask 261120
    %v96 = vsel %vm94, %v23, 0
    %98 = vmatprep.subr.bf16.mxu0 %v79
    %99 = vmatpush1.bf16.msra.mxu0 %v78
    %100 = vmatprep.subr.bf16.mxu0 %v83
    %101 = vmatpush1.bf16.msra.mxu0 %v82
    %102 = vmatprep.subr.bf16.mxu0 0
    %103 = vmatpush1.bf16.msra.mxu0 0
    %104 = vmatprep.subr.bf16.mxu0 0
    %105 = vmatpush1.bf16.msra.mxu0 0
    %106 = vmatprep.subr.bf16.mxu0 0
    %107 = vmatpush1.bf16.msra.mxu0 0
    %108 = vmatprep.subr.bf16.mxu0 0
    %109 = vmatpush1.bf16.msra.mxu0 0
    %110 = vmatprep.subr.bf16.mxu0 0
    %111 = vmatpush1.bf16.msra.mxu0 0
    %112 = vmatprep.subr.bf16.mxu0 0
    %113 = vmatpush1.bf16.msra.mxu0 0
    %114 = vmatprep.subr.bf16.mxu0 0
    %115 = vmatpush1.bf16.msra.mxu0 0
    %116 = vmatprep.subr.bf16.mxu0 0
    %117 = vmatpush1.bf16.msra.mxu0 0
    %118 = vmatprep.subr.bf16.mxu0 0
    %119 = vmatpush1.bf16.msra.mxu0 0
    %120 = vmatprep.subr.bf16.mxu0 0
    %121 = vmatpush1.bf16.msra.mxu0 0
    %122 = vmatprep.subr.bf16.mxu0 0
    %123 = vmatpush1.bf16.msra.mxu0 0
    %124 = vmatprep.subr.bf16.mxu0 0
    %125 = vmatpush1.bf16.msra.mxu0 0
    %126 = vmatprep.subr.bf16.mxu0 0
    %127 = vmatpush1.bf16.msra.mxu0 0
    %128 = vmatprep.subr.bf16.mxu0 0
    %129 = vmatpush1.bf16.msra.mxu0 0
    %130 = vmatprep.mubr.bf16.mxu0 0
    %131 = vmatmul.mubr.bf16.gmra.mrb[0].mxu0 %v96
    %v132 = vpop.f32.mrb[0].mxu0
    %v133 = vadd.f32 %v37, %v132
    %v134 = vpop.f32.mrb[0].mxu0
    %v135 = vadd.f32 %v41, %v134
    %v136 = vpop.f32.mrb[0].mxu0
    %v137 = vpop.f32.mrb[0].mxu0
    %138 = vdwg.mxu0
    %139 = vmatprep.subr.bf16.mxu0 %v81
    %140 = vmatpush1.bf16.msra.mxu0 %v80
    %141 = vmatprep.subr.bf16.mxu0 %v85
    %142 = vmatpush1.bf16.msra.mxu0 %v84
    %143 = vmatprep.subr.bf16.mxu0 0
    %144 = vmatpush1.bf16.msra.mxu0 0
    %145 = vmatprep.subr.bf16.mxu0 0
    %146 = vmatpush1.bf16.msra.mxu0 0
    %147 = vmatprep.subr.bf16.mxu0 0
    %148 = vmatpush1.bf16.msra.mxu0 0
    %149 = vmatprep.subr.bf16.mxu0 0
    %150 = vmatpush1.bf16.msra.mxu0 0
    %151 = vmatprep.subr.bf16.mxu0 0
    %152 = vmatpush1.bf16.msra.mxu0 0
    %153 = vmatprep.subr.bf16.mxu0 0
    %154 = vmatpush1.bf16.msra.mxu0 0
    %155 = vmatprep.subr.bf16.mxu0 0
    %156 = vmatpush1.bf16.msra.mxu0 0
    %157 = vmatprep.subr.bf16.mxu0 0
    %158 = vmatpush1.bf16.msra.mxu0 0
    %159 = vmatprep.subr.bf16.mxu0 0
    %160 = vmatpush1.bf16.msra.mxu0 0
    %161 = vmatprep.subr.bf16.mxu0 0
    %162 = vmatpush1.bf16.msra.mxu0 0
    %163 = vmatprep.subr.bf16.mxu0 0
    %164 = vmatpush1.bf16.msra.mxu0 0
    %165 = vmatprep.subr.bf16.mxu0 0
    %166 = vmatpush1.bf16.msra.mxu0 0
    %167 = vmatprep.subr.bf16.mxu0 0
    %168 = vmatpush1.bf16.msra.mxu0 0
    %169 = vmatprep.subr.bf16.mxu0 0
    %170 = vmatpush1.bf16.msra.mxu0 0
    %171 = vmatprep.mubr.bf16.mxu0 0
    %172 = vmatmul.mubr.bf16.gmra.mrb[0].mxu0 %v96
    %v173 = vpop.f32.mrb[0].mxu0
    %v174 = vadd.f32 %v45, %v173
    %v175 = vpop.f32.mrb[0].mxu0
    %v176 = vadd.f32 %v49, %v175
    %v177 = vpop.f32.mrb[0].mxu0
    %v178 = vpop.f32.mrb[0].mxu0
    %179 = vdwg.mxu0
    %v180 = vmax.f32 %v133, 0.0
    %v181 = vmax.f32 %v135, 0.0
    %v182 = vmax.f32 %v174, 0.0
    %v183 = vmax.f32 %v176, 0.0
    %v184 = vpack.c.bf16 %v180, %v180
    %v185 = vpack.c.bf16 %v181, %v181
    %v186 = vpack.c.bf16 %v182, %v182
    %v187 = vpack.c.bf16 %v183, %v183
    %v188 = vld [vmem:[%s3] sm:$0xf]
    %v189 = vld [vmem:[%s3 + $0x4] sm:$0xf]
    %v190 = vld [vmem:[%s3 + $0x8] sm:$0xf]
    %v191 = vld [vmem:[%s3 + $0xc] sm:$0xf]
    %v192 = vld [vmem:[%s3 + $0x10] sm:$0xf]
    %v193 = vld [vmem:[%s3 + $0x14] sm:$0xf]
    %v194 = vld [vmem:[%s3 + $0x18] sm:$0xf]
    %v195 = vld [vmem:[%s3 + $0x1c] sm:$0xf]
    %v196 = vld [vmem:[%s3 + $0x20] sm:$0xf]
    %v197 = vld [vmem:[%s3 + $0x24] sm:$0xf]
    %v198 = vld [vmem:[%s3 + $0x28] sm:$0xf]
    %v199 = vld [vmem:[%s3 + $0x2c] sm:$0xf]
    %v200 = vld [vmem:[%s3 + $0x30] sm:$0xf]
    %v201 = vld [vmem:[%s3 + $0x34] sm:$0xf]
    %v202 = vld [vmem:[%s3 + $0x38] sm:$0xf]
    %v203 = vld [vmem:[%s3 + $0x3c] sm:$0xf]
    %v204 = vld [vmem:[%s3 + $0x40] sm:$0xf]
    %v205 = vld [vmem:[%s3 + $0x44] sm:$0xf]
    %v206 = vld [vmem:[%s3 + $0x48] sm:$0xf]
    %v207 = vld [vmem:[%s3 + $0x4c] sm:$0xf]
    %v208 = vld [vmem:[%s3 + $0x50] sm:$0xf]
    %v209 = vld [vmem:[%s3 + $0x54] sm:$0xf]
    %v210 = vld [vmem:[%s3 + $0x58] sm:$0xf]
    %v211 = vld [vmem:[%s3 + $0x5c] sm:$0xf]
    %v212 = vld [vmem:[%s3 + $0x60] sm:$0xf]
    %v213 = vld [vmem:[%s3 + $0x64] sm:$0xf]
    %v214 = vld [vmem:[%s3 + $0x68] sm:$0xf]
    %v215 = vld [vmem:[%s3 + $0x6c] sm:$0xf]
    %v216 = vld [vmem:[%s3 + $0x70] sm:$0xf]
    %v217 = vld [vmem:[%s3 + $0x74] sm:$0xf]
    %v218 = vld [vmem:[%s3 + $0x78] sm:$0xf]
    %v219 = vld [vmem:[%s3 + $0x7c] sm:$0xf]
    %v220 = vld [vmem:[%s3 + $0x80] sm:$0xf]
    %v221 = vld [vmem:[%s3 + $0x84] sm:$0xf]
    %v222 = vld [vmem:[%s3 + $0x88] sm:$0xf]
    %v223 = vld [vmem:[%s3 + $0x8c] sm:$0xf]
    %v224 = vld [vmem:[%s3 + $0x90] sm:$0xf]
    %v225 = vld [vmem:[%s3 + $0x94] sm:$0xf]
    %v226 = vld [vmem:[%s3 + $0x98] sm:$0xf]
    %v227 = vld [vmem:[%s3 + $0x9c] sm:$0xf]
    %v228 = vld [vmem:[%s3 + $0xa0] sm:$0xf]
    %v229 = vld [vmem:[%s3 + $0xa4] sm:$0xf]
    %v230 = vld [vmem:[%s3 + $0xa8] sm:$0xf]
    %v231 = vld [vmem:[%s3 + $0xac] sm:$0xf]
    %v232 = vld [vmem:[%s3 + $0xb0] sm:$0xf]
    %v233 = vld [vmem:[%s3 + $0xb4] sm:$0xf]
    %v234 = vld [vmem:[%s3 + $0xb8] sm:$0xf]
    %v235 = vld [vmem:[%s3 + $0xbc] sm:$0xf]
    %v236 = vld [vmem:[%s3 + $0xc0] sm:$0xf]
    %v237 = vld [vmem:[%s3 + $0xc4] sm:$0xf]
    %v238 = vld [vmem:[%s3 + $0xc8] sm:$0xf]
    %v239 = vld [vmem:[%s3 + $0xcc] sm:$0xf]
    %v240 = vld [vmem:[%s3 + $0xd0] sm:$0xf]
    %v241 = vld [vmem:[%s3 + $0xd4] sm:$0xf]
    %v242 = vld [vmem:[%s3 + $0xd8] sm:$0xf]
    %v243 = vld [vmem:[%s3 + $0xdc] sm:$0xf]
    %v244 = vld [vmem:[%s3 + $0xe0] sm:$0xf]
    %v245 = vld [vmem:[%s3 + $0xe4] sm:$0xf]
    %v246 = vld [vmem:[%s3 + $0xe8] sm:$0xf]
    %v247 = vld [vmem:[%s3 + $0xec] sm:$0xf]
    %v248 = vld [vmem:[%s3 + $0xf0] sm:$0xf]
    %v249 = vld [vmem:[%s3 + $0xf4] sm:$0xf]
    %v250 = vld [vmem:[%s3 + $0xf8] sm:$0xf]
    %v251 = vld [vmem:[%s3 + $0xfc] sm:$0xf]
    %v252 = vld [vmem:[%s4] sm:$0x1]
    %v254 = vlaneseq
    %v255 = vshrl.u32 %v254, 7
    %v256 = vsub.s32 0, %v255
    %v257 = vrot.slane %v252, %v256
    %v323 = vunpack.c.l.b16 %v188
    %v324 = vunpack.c.l.b16 %v189
    %v325 = vunpack.c.l.b16 %v190
    %v326 = vunpack.c.l.b16 %v191
    %v327 = vunpack.c.l.b16 %v192
    %v328 = vunpack.c.l.b16 %v193
    %v329 = vunpack.c.l.b16 %v194
    %v330 = vunpack.c.l.b16 %v195
    %v331 = vunpack.c.l.b16 %v196
    %v332 = vunpack.c.l.b16 %v197
    %v333 = vunpack.c.l.b16 %v198
    %v334 = vunpack.c.l.b16 %v199
    %v335 = vunpack.c.l.b16 %v200
    %v336 = vunpack.c.l.b16 %v201
    %v337 = vunpack.c.l.b16 %v202
    %v338 = vunpack.c.l.b16 %v203
    %v339 = vunpack.c.l.b16 %v204
    %v340 = vunpack.c.l.b16 %v205
    %v341 = vunpack.c.l.b16 %v206
    %v342 = vunpack.c.l.b16 %v207
    %v343 = vunpack.c.l.b16 %v208
    %v344 = vunpack.c.l.b16 %v209
    %v345 = vunpack.c.l.b16 %v210
    %v346 = vunpack.c.l.b16 %v211
    %v347 = vunpack.c.l.b16 %v212
    %v348 = vunpack.c.l.b16 %v213
    %v349 = vunpack.c.l.b16 %v214
    %v350 = vunpack.c.l.b16 %v215
    %v351 = vunpack.c.l.b16 %v216
    %v352 = vunpack.c.l.b16 %v217
    %v353 = vunpack.c.l.b16 %v218
    %v354 = vunpack.c.l.b16 %v219
    %v355 = vunpack.c.l.b16 %v220
    %v356 = vunpack.c.l.b16 %v221
    %v357 = vunpack.c.l.b16 %v222
    %v358 = vunpack.c.l.b16 %v223
    %v359 = vunpack.c.l.b16 %v224
    %v360 = vunpack.c.l.b16 %v225
    %v361 = vunpack.c.l.b16 %v226
    %v362 = vunpack.c.l.b16 %v227
    %v363 = vunpack.c.l.b16 %v228
    %v364 = vunpack.c.l.b16 %v229
    %v365 = vunpack.c.l.b16 %v230
    %v366 = vunpack.c.l.b16 %v231
    %v367 = vunpack.c.l.b16 %v232
    %v368 = vunpack.c.l.b16 %v233
    %v369 = vunpack.c.l.b16 %v234
    %v370 = vunpack.c.l.b16 %v235
    %v371 = vunpack.c.l.b16 %v236
    %v372 = vunpack.c.l.b16 %v237
    %v373 = vunpack.c.l.b16 %v238
    %v374 = vunpack.c.l.b16 %v239
    %v375 = vunpack.c.l.b16 %v240
    %v376 = vunpack.c.l.b16 %v241
    %v377 = vunpack.c.l.b16 %v242
    %v378 = vunpack.c.l.b16 %v243
    %v379 = vunpack.c.l.b16 %v244
    %v380 = vunpack.c.l.b16 %v245
    %v381 = vunpack.c.l.b16 %v246
    %v382 = vunpack.c.l.b16 %v247
    %v383 = vunpack.c.l.b16 %v248
    %v384 = vunpack.c.l.b16 %v249
    %v385 = vunpack.c.l.b16 %v250
    %v386 = vunpack.c.l.b16 %v251
    %v387 = vpack.c.b16 %v324, %v323
    %v388 = vpack.c.b16 %v326, %v325
    %v389 = vpack.c.b16 %v328, %v327
    %v390 = vpack.c.b16 %v330, %v329
    %v391 = vpack.c.b16 %v332, %v331
    %v392 = vpack.c.b16 %v334, %v333
    %v393 = vpack.c.b16 %v336, %v335
    %v394 = vpack.c.b16 %v338, %v337
    %v395 = vpack.c.b16 %v340, %v339
    %v396 = vpack.c.b16 %v342, %v341
    %v397 = vpack.c.b16 %v344, %v343
    %v398 = vpack.c.b16 %v346, %v345
    %v399 = vpack.c.b16 %v348, %v347
    %v400 = vpack.c.b16 %v350, %v349
    %v401 = vpack.c.b16 %v352, %v351
    %v402 = vpack.c.b16 %v354, %v353
    %v403 = vpack.c.b16 %v356, %v355
    %v404 = vpack.c.b16 %v358, %v357
    %v405 = vpack.c.b16 %v360, %v359
    %v406 = vpack.c.b16 %v362, %v361
    %v407 = vpack.c.b16 %v364, %v363
    %v408 = vpack.c.b16 %v366, %v365
    %v409 = vpack.c.b16 %v368, %v367
    %v410 = vpack.c.b16 %v370, %v369
    %v411 = vpack.c.b16 %v372, %v371
    %v412 = vpack.c.b16 %v374, %v373
    %v413 = vpack.c.b16 %v376, %v375
    %v414 = vpack.c.b16 %v378, %v377
    %v415 = vpack.c.b16 %v380, %v379
    %v416 = vpack.c.b16 %v382, %v381
    %v417 = vpack.c.b16 %v384, %v383
    %v418 = vpack.c.b16 %v386, %v385
    %451 = vmatprep.subr.bf16.mxu0 0
    %452 = vmatpush1.bf16.msra.mxu0 %v387
    %453 = vmatprep.subr.bf16.mxu0 0
    %454 = vmatpush1.bf16.msra.mxu0 %v388
    %455 = vmatprep.subr.bf16.mxu0 0
    %456 = vmatpush1.bf16.msra.mxu0 %v389
    %457 = vmatprep.subr.bf16.mxu0 0
    %458 = vmatpush1.bf16.msra.mxu0 %v390
    %459 = vmatprep.subr.bf16.mxu0 0
    %460 = vmatpush1.bf16.msra.mxu0 %v391
    %461 = vmatprep.subr.bf16.mxu0 0
    %462 = vmatpush1.bf16.msra.mxu0 %v392
    %463 = vmatprep.subr.bf16.mxu0 0
    %464 = vmatpush1.bf16.msra.mxu0 %v393
    %465 = vmatprep.subr.bf16.mxu0 0
    %466 = vmatpush1.bf16.msra.mxu0 %v394
    %467 = vmatprep.subr.bf16.mxu0 0
    %468 = vmatpush1.bf16.msra.mxu0 %v395
    %469 = vmatprep.subr.bf16.mxu0 0
    %470 = vmatpush1.bf16.msra.mxu0 %v396
    %471 = vmatprep.subr.bf16.mxu0 0
    %472 = vmatpush1.bf16.msra.mxu0 %v397
    %473 = vmatprep.subr.bf16.mxu0 0
    %474 = vmatpush1.bf16.msra.mxu0 %v398
    %475 = vmatprep.subr.bf16.mxu0 0
    %476 = vmatpush1.bf16.msra.mxu0 %v399
    %477 = vmatprep.subr.bf16.mxu0 0
    %478 = vmatpush1.bf16.msra.mxu0 %v400
    %479 = vmatprep.subr.bf16.mxu0 0
    %480 = vmatpush1.bf16.msra.mxu0 %v401
    %481 = vmatprep.subr.bf16.mxu0 0
    %482 = vmatpush1.bf16.msra.mxu0 %v402
    %483 = vmatprep.mubr.bf16.mxu0 %v185
    %484 = vmatmul.mubr.bf16.gmra.mrb[0].mxu0 %v184
    %v485 = vpop.f32.mrb[0].mxu0
    %v486 = vadd.f32 %v257, %v485
    %v487 = vpop.f32.mrb[0].mxu0
    %v488 = vpop.f32.mrb[0].mxu0
    %v489 = vpop.f32.mrb[0].mxu0
    %490 = vdwg.mxu0
    %491 = vmatprep.subr.bf16.mxu0 0
    %492 = vmatpush1.bf16.msra.mxu0 %v403
    %493 = vmatprep.subr.bf16.mxu0 0
    %494 = vmatpush1.bf16.msra.mxu0 %v404
    %495 = vmatprep.subr.bf16.mxu0 0
    %496 = vmatpush1.bf16.msra.mxu0 %v405
    %497 = vmatprep.subr.bf16.mxu0 0
    %498 = vmatpush1.bf16.msra.mxu0 %v406
    %499 = vmatprep.subr.bf16.mxu0 0
    %500 = vmatpush1.bf16.msra.mxu0 %v407
    %501 = vmatprep.subr.bf16.mxu0 0
    %502 = vmatpush1.bf16.msra.mxu0 %v408
    %503 = vmatprep.subr.bf16.mxu0 0
    %504 = vmatpush1.bf16.msra.mxu0 %v409
    %505 = vmatprep.subr.bf16.mxu0 0
    %506 = vmatpush1.bf16.msra.mxu0 %v410
    %507 = vmatprep.subr.bf16.mxu0 0
    %508 = vmatpush1.bf16.msra.mxu0 %v411
    %509 = vmatprep.subr.bf16.mxu0 0
    %510 = vmatpush1.bf16.msra.mxu0 %v412
    %511 = vmatprep.subr.bf16.mxu0 0
    %512 = vmatpush1.bf16.msra.mxu0 %v413
    %513 = vmatprep.subr.bf16.mxu0 0
    %514 = vmatpush1.bf16.msra.mxu0 %v414
    %515 = vmatprep.subr.bf16.mxu0 0
    %516 = vmatpush1.bf16.msra.mxu0 %v415
    %517 = vmatprep.subr.bf16.mxu0 0
    %518 = vmatpush1.bf16.msra.mxu0 %v416
    %519 = vmatprep.subr.bf16.mxu0 0
    %520 = vmatpush1.bf16.msra.mxu0 %v417
    %521 = vmatprep.subr.bf16.mxu0 0
    %522 = vmatpush1.bf16.msra.mxu0 %v418
    %523 = vmatprep.mubr.bf16.mxu0 %v187
    %524 = vmatmul.mubr.bf16.gmra.mrb[0].mxu0 %v186
    %v525 = vpop.f32.mrb[0].mxu0
    %v526 = vadd.f32 %v486, %v525
    %v527 = vpop.f32.mrb[0].mxu0
    %v528 = vpop.f32.mrb[0].mxu0
    %v529 = vpop.f32.mrb[0].mxu0
    %530 = vdwg.mxu0
    %531 = vst.msk [vmem:[#allocation2] sm:$0xff] %vm94, %v526
    // Predicated region
    $region22: #{tpu_custom_call.1} parent=1 // pred_check
      _
    $region23: #{tpu_custom_call.1} parent=1 // pred_check_branch
      %533 = sbr.rel (0) target = $region25
    $region24: #{tpu_custom_call.1} parent=1 // pred_region
      %s535 = ssub.s32 128, 128
      %536 = vsyncadd [#allocation3], %s535
      %s538 = sshll.u32 [#allocation2], 4
      %s539 = int_to_ptr.vmem [resolvable:$true] %s538
      %541 = dma.vmem_to_hbm [thread:$0]  %s539, 128, %s5, [#allocation3]
    $region25: #{tpu_custom_call.1} parent=1 // pred_fallthru
      _
    // Predicated region
    $region26: #{tpu_custom_call.1} parent=1 // pred_check
      _
    $region27: #{tpu_custom_call.1} parent=1 // pred_check_branch
      %543 = sbr.rel (0) target = $region29
    $region28: #{tpu_custom_call.1} parent=1 // pred_region
      %544 = dma.done [#allocation3], 128
    $region29: #{tpu_custom_call.1} parent=1 // pred_fallthru
      _
    %545 = vsyncpa [#allocation3], 1

</llo_original>
